<compile_context>
chip_gen: v5e
topology: v5e:2x2
jax: 0.10.0
libtpu: 0.0.40
codegen_flags: <defaults>
</compile_context>

<pallas_src>
import jax
import jax.numpy as jnp
import numpy as np
from jax.experimental import pallas as pl
from jax.experimental.pallas import tpu as pltpu


def _patch_embed_kernel(patches_ref, w_ref, b_ref, out_ref):
    # bf16 x bf16 matmul on the MXU with f32 accumulation, bias add in f32.
    acc = jnp.dot(patches_ref[...], w_ref[...],
                  preferred_element_type=jnp.float32)
    out_ref[...] = (acc + b_ref[...]).astype(out_ref.dtype)


def _choose_row_tile(M):
    """Row tile for the patch stream.

    - multiple of 16 whenever TM < M (bf16 sublane packing),
    - capped at 512 (big DMA bursts, fits every generation's VMEM),
    - >= 2 grid steps for medium M so both v7x TensorCores are busy,
    - TM == M (full dim, always legal) for small / oddly-sized M.
    """
    if M > 512:
        return 512
    if M >= 32 and M % 32 == 0:
        return M // 2
    return M


def patch_embed_matmul(patches, weight, bias, out_dtype=jnp.float32):
    """patches: (M, K) bf16, weight: (K, E) bf16, bias: (E,) f32 -> (M, E)."""
    M, K = patches.shape
    K2, E = weight.shape
    assert K == K2

    TM = _choose_row_tile(M)
    grid = (pl.cdiv(M, TM),)          # ragged last block handled by masking
    bias2d = bias.astype(jnp.float32).reshape(1, E)

    out_bytes = np.dtype(out_dtype).itemsize
    # Scoped-VMEM budget: double-buffered patch + out tiles, resident
    # weight/bias (counted 2x for safety), plus headroom; 48 MiB ceiling so
    # v7x (64 MiB physical) keeps compiler-scratch headroom.
    vmem_needed = (2 * TM * K * 2              # patches tile, bf16, dbl-buffered
                   + 2 * TM * E * out_bytes    # out tile, dbl-buffered
                   + 2 * K * E * 2             # weight, bf16
                   + 2 * E * 4)                # bias, f32
    vmem_limit = int(min(max(2 * vmem_needed, 16 * 1024 * 1024),
                         48 * 1024 * 1024))

    cost = pl.CostEstimate(
        flops=2 * M * K * E,
        transcendentals=0,
        bytes_accessed=M * K * 2 + K * E * 2 + M * E * out_bytes + E * 4,
    )

    return pl.pallas_call(
        _patch_embed_kernel,
        grid=grid,
        in_specs=[
            pl.BlockSpec((TM, K), lambda i: (i, 0)),   # streamed patch rows
            pl.BlockSpec((K, E), lambda i: (0, 0)),    # weight, VMEM-resident
            pl.BlockSpec((1, E), lambda i: (0, 0)),    # bias, VMEM-resident
        ],
        out_specs=pl.BlockSpec((TM, E), lambda i: (i, 0)),
        out_shape=jax.ShapeDtypeStruct((M, E), out_dtype),
        compiler_params=pltpu.CompilerParams(
            dimension_semantics=("parallel",),
            vmem_limit_bytes=vmem_limit,
        ),
        cost_estimate=cost,
    )(patches, weight, bias2d)


def patch_embed_forward(x, conv_weight, conv_bias, patch_size,
                        out_dtype=jnp.float32):
    """Mirror of PatchEmbed.forward.

    x:           (B, C, T, H, W)   float32
    conv_weight: (E, C, p, p)      float32  (PyTorch Conv2d layout)
    conv_bias:   (E,)              float32
    returns (tokens, T, W_patches) with tokens: (B*T, num_patches, E).
    """
    B, C, T, H, W = x.shape
    p = patch_size
    E = conv_weight.shape[0]
    Hp, Wp = H // p, W // p
    K = C * p * p
    M = B * T * Hp * Wp

    # Single fused rearrangement pass (read f32, write bf16): the
    # '(b t) c h w' rearrange and the non-overlapping patch extraction are
    # expressed as ONE transpose; the bf16 cast fuses into the same copy.
    #   (B, C, T, Hp, p, Wp, p) -> (B, T, Hp, Wp, C, p, p) -> (M, K)
    patches = x.astype(jnp.bfloat16).reshape(B, C, T, Hp, p, Wp, p)
    patches = jnp.transpose(patches, (0, 2, 3, 5, 1, 4, 6)).reshape(M, K)

    # Conv2d weight (E, C, p, p) -> (K, E) bf16; bias f32.  Tiny tensors.
    w_mat = conv_weight.reshape(E, K).T.astype(jnp.bfloat16)

    out = patch_embed_matmul(patches, w_mat, conv_bias.astype(jnp.float32),
                             out_dtype=out_dtype)

    tokens = out.reshape(B * T, Hp * Wp, E)   # == flatten(2).transpose(1, 2)
    return tokens, T, Wp


if __name__ == "__main__":
    # Small, module-consistent shapes: img_size=16, patch_size=8, in_chans=3,
    # embed_dim=32, batch=2, frames T=2.
    B, C, T, H, W = 2, 3, 2, 16, 16
    p = 8
    E = 32

    key = jax.random.PRNGKey(0)
    kx, kw, kb = jax.random.split(key, 3)
    x = jax.random.normal(kx, (B, C, T, H, W), dtype=jnp.float32)
    # Deterministic parameter init (kaiming-uniform-like scale).
    fan_in = C * p * p
    bound = 1.0 / (fan_in ** 0.5)
    conv_weight = jax.random.uniform(kw, (E, C, p, p), jnp.float32, -bound, bound)
    conv_bias = jax.random.uniform(kb, (E,), jnp.float32, -bound, bound)

    tokens, T_out, W_out = patch_embed_forward(x, conv_weight, conv_bias, p)
    tokens = jax.block_until_ready(tokens)

    # Reference check: lax conv (== nn.Conv2d stride=kernel) on the same
    # bf16-rounded operands (kernel computes bf16 x bf16 with f32 accumulation).
    x_r = x.astype(jnp.bfloat16).astype(jnp.float32)
    w_r = conv_weight.astype(jnp.bfloat16).astype(jnp.float32)
    x_bt_r = jnp.transpose(x_r, (0, 2, 1, 3, 4)).reshape(B * T, C, H, W)
    ref = jax.lax.conv_general_dilated(
        x_bt_r, w_r, window_strides=(p, p), padding="VALID",
        dimension_numbers=("NCHW", "OIHW", "NCHW"),
        precision=jax.lax.Precision.HIGHEST)
    ref = ref + conv_bias[None, :, None, None]
    ref_tokens = ref.reshape(B * T, E, -1).transpose(0, 2, 1)

    assert tokens.shape == (B * T, (H // p) * (W // p), E)
    assert T_out == T and W_out == W // p
    assert jnp.allclose(tokens, ref_tokens, atol=2e-3, rtol=2e-3)
    print("KERNEL_OK")
</pallas_src>

<mosaic_0001>
module attributes {stable_mosaic.version = 11 : i64} {
  func.func @_patch_embed_kernel(%arg0: i32, %arg1: memref<16x192xbf16, #tpu.memory_space<vmem>>, %arg2: memref<192x32xbf16, #tpu.memory_space<vmem>>, %arg3: memref<1x32xf32, #tpu.memory_space<vmem>>, %arg4: memref<16x32xf32, #tpu.memory_space<vmem>>) attributes {dimension_semantics = [#tpu.dimension_semantics<parallel>], iteration_bounds = array<i64: 1>, scalar_prefetch = 0 : i64, scratch_operands = 0 : i64, tpu.core_type = #tpu.core_type<tc>, window_params = [{transform_indices = @transform_0, window_bounds = array<i64: 16, 192>}, {pipeline_mode = #tpu.pipeline_mode<synchronous>, transform_indices = @transform_1, window_bounds = array<i64: 192, 32>}, {pipeline_mode = #tpu.pipeline_mode<synchronous>, transform_indices = @transform_2, window_bounds = array<i64: 1, 32>}, {transform_indices = @transform_3, window_bounds = array<i64: 16, 32>}]} {
    %c0 = arith.constant 0 : index
    %c0_0 = arith.constant 0 : index
    %0 = vector.load %arg1[%c0, %c0_0] : memref<16x192xbf16, #tpu.memory_space<vmem>>, vector<16x192xbf16>
    %c0_1 = arith.constant 0 : index
    %c0_2 = arith.constant 0 : index
    %1 = vector.load %arg2[%c0_1, %c0_2] : memref<192x32xbf16, #tpu.memory_space<vmem>>, vector<192x32xbf16>
    %cst = arith.constant dense<0.000000e+00> : vector<16x32xf32>
    %2 = tpu.matmul %0, %1, %cst {dimension_numbers = #tpu.dot_dimension_numbers<[1], [0], [0], [1], [0, 0, 1, 1], [], []>} : vector<16x192xbf16>, vector<192x32xbf16>, vector<16x32xf32> -> vector<16x32xf32>
    %c0_3 = arith.constant 0 : index
    %c0_4 = arith.constant 0 : index
    %3 = vector.load %arg3[%c0_3, %c0_4] : memref<1x32xf32, #tpu.memory_space<vmem>>, vector<1x32xf32>
    %4 = vector.broadcast %3 : vector<1x32xf32> to vector<16x32xf32>
    %5 = arith.addf %2, %4 : vector<16x32xf32>
    %c0_5 = arith.constant 0 : index
    %c0_6 = arith.constant 0 : index
    %6 = vector.load %arg4[%c0_5, %c0_6] : memref<16x32xf32, #tpu.memory_space<vmem>>, vector<16x32xf32>
    tpu.vector_store %arg4[%c0_5, %c0_6], %5 {strides = array<i32>} : memref<16x32xf32, #tpu.memory_space<vmem>>, vector<16x32xf32>,
    return
  }
  func.func @transform_0(%arg0: i32) -> (i32, i32) {
    %c0_i32 = arith.constant 0 : i32
    %c0_i32_0 = arith.constant 0 : i32
    return %arg0, %c0_i32 : i32, i32
  }
  func.func @transform_1(%arg0: i32) -> (i32, i32) {
    %c0_i32 = arith.constant 0 : i32
    %c0_i32_0 = arith.constant 0 : i32
    %c0_i32_1 = arith.constant 0 : i32
    return %c0_i32, %c0_i32_0 : i32, i32
  }
  func.func @transform_2(%arg0: i32) -> (i32, i32) {
    %c0_i32 = arith.constant 0 : i32
    %c0_i32_0 = arith.constant 0 : i32
    %c0_i32_1 = arith.constant 0 : i32
    return %c0_i32, %c0_i32_0 : i32, i32
  }
  func.func @transform_3(%arg0: i32) -> (i32, i32) {
    %c0_i32 = arith.constant 0 : i32
    %c0_i32_0 = arith.constant 0 : i32
    return %arg0, %c0_i32 : i32, i32
  }
}

</mosaic_0001>

<llo_original>
// kernel: tpu_custom_call.1
$region0: #{tpu_custom_call.1}
  #allocation0 [shape = 'u32[]', space=smem, size = 0x4, offset = 0x4, fixed_abs, tag = 'smem constant byte address 0x4 - core index']
  #allocation1 [shape = 'u32[72,128]{1,0:T(1,128)}', space=vmem, size = 0x9000, scoped, tag = 'internal scratch']
  %s0 = inlined_call_operand.vmem [shape: bf16[16,192], index: 0, kind: input, shape index: {}]
  %s1 = inlined_call_operand.vmem [shape: bf16[192,32], index: 1, kind: input, shape index: {}]
  %s2 = inlined_call_operand.vmem [shape: f32[1,32], index: 2, kind: input, shape index: {}]
  %s3 = inlined_call_operand.hbm [shape: f32[16,32], index: 3, kind: output, shape index: {}]
  %s4 = sld [smem:[#allocation0]]
  $region22: #{tpu_custom_call.1} parent=0
    _
  %s6 = ssub.s32 1, %s4
  %s7 = scalar_select 0, %s6, %s4
  $region1: #{tpu_custom_call.1} parent=0
    #allocation2 [shape = 'u8[8192]{0}', space=vmem, size = 0x2000, scoped, tag = 'output window, operand 0, single buffered']
    #allocation3 [shape = 's32[1]{0}', space=sflag, size = 0x4, scoped, tag = 'scoped memory for tpu_custom_call.1']
    %8 = vsyncpa [#allocation3], 0
    // Predicated region
    $region2: #{tpu_custom_call.1} parent=1 // pred_check
      _
    $region3: #{tpu_custom_call.1} parent=1 // pred_check_branch
      %10 = sbr.rel (0) target = $region5
    $region4: #{tpu_custom_call.1} parent=1 // pred_region
      _
    $region5: #{tpu_custom_call.1} parent=1 // pred_fallthru
      _
    // Predicated region
    $region6: #{tpu_custom_call.1} parent=1 // pred_check
      _
    $region7: #{tpu_custom_call.1} parent=1 // pred_check_branch
      %12 = sbr.rel (0) target = $region9
    $region8: #{tpu_custom_call.1} parent=1 // pred_region
      _
    $region9: #{tpu_custom_call.1} parent=1 // pred_fallthru
      _
    // Predicated region
    $region10: #{tpu_custom_call.1} parent=1 // pred_check
      _
    $region11: #{tpu_custom_call.1} parent=1 // pred_check_branch
      %14 = sbr.rel (0) target = $region13
    $region12: #{tpu_custom_call.1} parent=1 // pred_region
      _
    $region13: #{tpu_custom_call.1} parent=1 // pred_fallthru
      _
    %v16 = vld [vmem:[%s0] sm:$0xff]
    %v17 = vld [vmem:[%s0 + $0x8] sm:$0xff]
    %v18 = vld [vmem:[%s1] sm:$0xf]
    %v19 = vld [vmem:[%s1 + $0x4] sm:$0xf]
    %v20 = vld [vmem:[%s1 + $0x8] sm:$0xf]
    %v21 = vld [vmem:[%s1 + $0xc] sm:$0xf]
    %v22 = vld [vmem:[%s1 + $0x10] sm:$0xf]
    %v23 = vld [vmem:[%s1 + $0x14] sm:$0xf]
    %v24 = vld [vmem:[%s1 + $0x18] sm:$0xf]
    %v25 = vld [vmem:[%s1 + $0x1c] sm:$0xf]
    %v26 = vld [vmem:[%s1 + $0x20] sm:$0xf]
    %v27 = vld [vmem:[%s1 + $0x24] sm:$0xf]
    %v28 = vld [vmem:[%s1 + $0x28] sm:$0xf]
    %v29 = vld [vmem:[%s1 + $0x2c] sm:$0xf]
    %v30 = vld [vmem:[%s1 + $0x30] sm:$0xf]
    %v31 = vld [vmem:[%s1 + $0x34] sm:$0xf]
    %v32 = vld [vmem:[%s1 + $0x38] sm:$0xf]
    %v33 = vld [vmem:[%s1 + $0x3c] sm:$0xf]
    %v34 = vld [vmem:[%s1 + $0x40] sm:$0xf]
    %v35 = vld [vmem:[%s1 + $0x44] sm:$0xf]
    %v36 = vld [vmem:[%s1 + $0x48] sm:$0xf]
    %v37 = vld [vmem:[%s1 + $0x4c] sm:$0xf]
    %v38 = vld [vmem:[%s1 + $0x50] sm:$0xf]
    %v39 = vld [vmem:[%s1 + $0x54] sm:$0xf]
    %v40 = vld [vmem:[%s1 + $0x58] sm:$0xf]
    %v41 = vld [vmem:[%s1 + $0x5c] sm:$0xf]
    %v42 = vld [vmem:[%s2] sm:$0x1]
    %v44 = vperm.slane %v42, 0
    %v48 = vunpack.c.l.b16 %v16
    %v49 = vunpack.c.h.b16 %v16
    %v50 = vunpack.c.l.b16 %v17
    %v51 = vunpack.c.h.b16 %v17
    %v52 = vpack.c.b16 %v50, %v48
    %v53 = vpack.c.b16 %v51, %v49
    %v79 = vunpack.c.l.b16 %v18
    %v80 = vunpack.c.l.b16 %v19
    %v81 = vunpack.c.l.b16 %v20
    %v82 = vunpack.c.l.b16 %v21
    %v83 = vunpack.c.l.b16 %v22
    %v84 = vunpack.c.l.b16 %v23
    %v85 = vunpack.c.l.b16 %v24
    %v86 = vunpack.c.l.b16 %v25
    %v87 = vunpack.c.l.b16 %v26
    %v88 = vunpack.c.l.b16 %v27
    %v89 = vunpack.c.l.b16 %v28
    %v90 = vunpack.c.l.b16 %v29
    %v91 = vunpack.c.l.b16 %v30
    %v92 = vunpack.c.l.b16 %v31
    %v93 = vunpack.c.l.b16 %v32
    %v94 = vunpack.c.l.b16 %v33
    %v95 = vunpack.c.l.b16 %v34
    %v96 = vunpack.c.l.b16 %v35
    %v97 = vunpack.c.l.b16 %v36
    %v98 = vunpack.c.l.b16 %v37
    %v99 = vunpack.c.l.b16 %v38
    %v100 = vunpack.c.l.b16 %v39
    %v101 = vunpack.c.l.b16 %v40
    %v102 = vunpack.c.l.b16 %v41
    %v103 = vpack.c.b16 %v80, %v79
    %v104 = vpack.c.b16 %v82, %v81
    %v105 = vpack.c.b16 %v84, %v83
    %v106 = vpack.c.b16 %v86, %v85
    %v107 = vpack.c.b16 %v88, %v87
    %v108 = vpack.c.b16 %v90, %v89
    %v109 = vpack.c.b16 %v92, %v91
    %v110 = vpack.c.b16 %v94, %v93
    %v111 = vpack.c.b16 %v96, %v95
    %v112 = vpack.c.b16 %v98, %v97
    %v113 = vpack.c.b16 %v100, %v99
    %v114 = vpack.c.b16 %v102, %v101
    %vm127 = vcmask 523264
    %v129 = vsel %vm127, %v53, 0
    %131 = vmatpush.bf16.msra.mxu0 %v110
    %132 = vmatpush.bf16.msra.mxu0 %v109
    %133 = vmatpush.bf16.msra.mxu0 %v108
    %134 = vmatpush.bf16.msra.mxu0 %v107
    %135 = vmatpush.bf16.msra.mxu0 %v106
    %136 = vmatpush.bf16.msra.mxu0 %v105
    %137 = vmatpush.bf16.msra.mxu0 %v104
    %138 = vmatpush.bf16.msra.mxu0 %v103
    %139 = vmatmul.bf16.gmra.mxu0 %v52
    %v140 = vpop.f32.mrf.mxu0
    %v141 = vadd.f32 %v44, %v140
    %v142 = vpop.f32.mrf.mxu0
    %v143 = vadd.f32 %v44, %v142
    %144 = vdwg.mxu0
    %145 = vmatpush.bf16.msra.mxu0 0
    %146 = vmatpush.bf16.msra.mxu0 0
    %147 = vmatpush.bf16.msra.mxu0 0
    %148 = vmatpush.bf16.msra.mxu0 0
    %149 = vmatpush.bf16.msra.mxu0 %v114
    %150 = vmatpush.bf16.msra.mxu0 %v113
    %151 = vmatpush.bf16.msra.mxu0 %v112
    %152 = vmatpush.bf16.msra.mxu0 %v111
    %153 = vmatmul.bf16.gmra.mxu0 %v129
    %v154 = vpop.f32.mrf.mxu0
    %v155 = vadd.f32 %v141, %v154
    %v156 = vpop.f32.mrf.mxu0
    %v157 = vadd.f32 %v143, %v156
    %158 = vdwg.mxu0
    %vm159 = vcmask 261120
    %160 = vst.msk [vmem:[#allocation2] sm:$0xff] %vm159, %v155
    %161 = vst.msk [vmem:[#allocation2 + $0x8] sm:$0xff] %vm159, %v157
    // Predicated region
    $region14: #{tpu_custom_call.1} parent=1 // pred_check
      _
    $region15: #{tpu_custom_call.1} parent=1 // pred_check_branch
      %163 = sbr.rel (0) target = $region17
    $region16: #{tpu_custom_call.1} parent=1 // pred_region
      %165 = vsyncadd [#allocation3], 0
      %s166 = sshll.u32 [#allocation2], 4
      %s167 = int_to_ptr.vmem [resolvable:$true] %s166
      %s168 = sshll.u32 %s3, 4
      %s169 = int_to_ptr.hbm [resolvable:$true] %s168
      %174 = dma.vmem_to_hbm [thread:$0]  %s167, 256, %s169, [#allocation3], 128, 128, 8
    $region17: #{tpu_custom_call.1} parent=1 // pred_fallthru
      _
    // Predicated region
    $region18: #{tpu_custom_call.1} parent=1 // pred_check
      _
    $region19: #{tpu_custom_call.1} parent=1 // pred_check_branch
      %176 = sbr.rel (0) target = $region21
    $region20: #{tpu_custom_call.1} parent=1 // pred_region
      %178 = dma.done [#allocation3], 256
    $region21: #{tpu_custom_call.1} parent=1 // pred_fallthru
      _
    %179 = vsyncpa [#allocation3], 1

</llo_original>
